<compile_context>
chip_gen: v6e
topology: v6e:2x2x1
jax: 0.10.0
libtpu: 0.0.40
codegen_flags: <defaults>
</compile_context>

<pallas_src>
import math

import jax
import jax.numpy as jnp
from jax import lax
from jax.experimental import pallas as pl
from jax.experimental.pallas import tpu as pltpu

_LN_EPS = 1e-5  # PyTorch nn.LayerNorm default


def _layernorm(v, gamma, beta):
    mu = jnp.mean(v, axis=-1, keepdims=True)
    var = jnp.mean(jnp.square(v - mu), axis=-1, keepdims=True)
    return (v - mu) * lax.rsqrt(var + _LN_EPS) * gamma + beta


def _encoder_layer_kernel(idx_ref,                         # SMEM (B, k) int32  (scalar prefetch)
                          x_ref,                           # VMEM (N, D) f32
                          g1_ref, b1_ref, g2_ref, b2_ref,  # VMEM (1, D) f32
                          w1_ref, fb1_ref, w2_ref, fb2_ref,  # bf16 weights / f32 biases
                          out_ref, attn_ref,               # VMEM (N, D), (k, N)
                          xbl_ref):                        # VMEM scratch (k, D) f32
    b = pl.program_id(0)
    n, d = x_ref.shape
    k = xbl_ref.shape[0]
    scale = 1.0 / math.sqrt(d)

    x = x_ref[...]                                          # (N, D) f32

    # ---- index-driven gather of the top-lambda UN-normalized patches (exact) ----
    def gather_body(j, carry):
        row = idx_ref[b, j]
        xbl_ref[pl.ds(j, 1), :] = x_ref[pl.ds(row, 1), :]
        return carry

    lax.fori_loop(0, k, gather_body, 0)
    top = xbl_ref[...]                                      # (k, D) f32

    # ---- sublayer[0] 'attn' (pre-LN, dropout = identity in eval) ----
    xn = _layernorm(x, g1_ref[...], b1_ref[...])            # (N, D) f32
    xn_bf = xn.astype(jnp.bfloat16)
    # fold 1/sqrt(D) into the (k, D) query before the bf16 cast (k*D mults, not k*N)
    q = (top * scale).astype(jnp.bfloat16)
    scores = lax.dot_general(                               # (k, N) f32, q @ xn^T form
        q, xn_bf,
        dimension_numbers=(((1,), (1,)), ((), ())),
        preferred_element_type=jnp.float32)
    m = jnp.max(scores, axis=-1, keepdims=True)
    p = jnp.exp(scores - m)
    # approx EUP reciprocal: attention rows sum to 1 only up to ~1e-4
    attn = p * pl.reciprocal(jnp.sum(p, axis=-1, keepdims=True), approx=True)
    attn_out = jnp.dot(attn.astype(jnp.bfloat16), xn_bf,
                       preferred_element_type=jnp.float32)  # (k, D) f32

    # x_big_lambda = top + attn_out (residual on the selected patches)
    xbl_ref[...] = top + attn_out

    # ---- scatter back: y = x;  y[top_idx, :] = x_big_lambda  (exact assignment) ----
    out_ref[...] = x
    def scatter_body(j, carry):
        row = idx_ref[b, j]
        out_ref[pl.ds(row, 1), :] = xbl_ref[pl.ds(j, 1), :]
        return carry

    lax.fori_loop(0, k, scatter_body, 0)
    y = out_ref[...]                                        # (N, D) f32

    # ---- sublayer[1] 'ff': y + FeedForward(LayerNorm2(y)) ----
    yn = _layernorm(y, g2_ref[...], b2_ref[...])
    h = jnp.dot(yn.astype(jnp.bfloat16), w1_ref[...],
                preferred_element_type=jnp.float32) + fb1_ref[...]      # (N, H)
    h = jnp.maximum(h, 0.0)
    ff = jnp.dot(h.astype(jnp.bfloat16), w2_ref[...],
                 preferred_element_type=jnp.float32) + fb2_ref[...]     # (N, D)

    out_ref[...] = (y + ff).astype(out_ref.dtype)
    attn_ref[...] = attn.astype(attn_ref.dtype)


def encoder_layer_forward(x, c, params, *, big_lambda, random_patch_share=0.0):
    """x: (B, N, D) instance features, c: (B, N, 1) criticality scores.

    params = (ln1_g, ln1_b, ln2_g, ln2_b, ff_w1, ff_b1, ff_w2, ff_b2)
    Returns (out (B, N, D), attentions (B, k, N)),
    k = ceil(big_lambda * (1 - random_patch_share)).
    """
    if random_patch_share != 0.0:
        # TODO(synk): host-side np.random.choice random-patch share not supported.
        raise NotImplementedError("random_patch_share > 0 is not supported")
    B, N, D = x.shape
    ln1_g, ln1_b, ln2_g, ln2_b, ff_w1, ff_b1, ff_w2, ff_b2 = params
    H = ff_w1.shape[-1]
    k = math.ceil(big_lambda * (1.0 - random_patch_share))
    assert 0 < k <= N

    # torch.sort(c, 1, descending=True)[:, :k]  ->  per-bag top-lambda indices.
    _, idx = lax.top_k(c[..., 0], k)                     # (B, k)
    idx = idx.astype(jnp.int32)

    # Hoist casts out of the grid loop: bf16 MXU weights, f32 LN params / biases.
    f32 = jnp.float32
    g1 = jnp.asarray(ln1_g, f32).reshape(1, D)
    b1 = jnp.asarray(ln1_b, f32).reshape(1, D)
    g2 = jnp.asarray(ln2_g, f32).reshape(1, D)
    b2 = jnp.asarray(ln2_b, f32).reshape(1, D)
    w1 = jnp.asarray(ff_w1, jnp.bfloat16)                # (D, H)
    fb1 = jnp.asarray(ff_b1, f32).reshape(1, H)
    w2 = jnp.asarray(ff_w2, jnp.bfloat16)                # (H, D)
    fb2 = jnp.asarray(ff_b2, f32).reshape(1, D)

    grid_spec = pltpu.PrefetchScalarGridSpec(
        num_scalar_prefetch=1,                           # idx -> SMEM, available pre-grid
        grid=(B,),
        in_specs=[
            pl.BlockSpec((None, N, D), lambda b, idx_r: (b, 0, 0)),   # x (batch dim squeezed)
            pl.BlockSpec((1, D), lambda b, idx_r: (0, 0)),            # ln1 gamma (invariant)
            pl.BlockSpec((1, D), lambda b, idx_r: (0, 0)),            # ln1 beta
            pl.BlockSpec((1, D), lambda b, idx_r: (0, 0)),            # ln2 gamma
            pl.BlockSpec((1, D), lambda b, idx_r: (0, 0)),            # ln2 beta
            pl.BlockSpec((D, H), lambda b, idx_r: (0, 0)),            # ff w1 (bf16)
            pl.BlockSpec((1, H), lambda b, idx_r: (0, 0)),            # ff b1
            pl.BlockSpec((H, D), lambda b, idx_r: (0, 0)),            # ff w2 (bf16)
            pl.BlockSpec((1, D), lambda b, idx_r: (0, 0)),            # ff b2
        ],
        out_specs=(
            pl.BlockSpec((None, N, D), lambda b, idx_r: (b, 0, 0)),   # out
            pl.BlockSpec((None, k, N), lambda b, idx_r: (b, 0, 0)),   # attention map
        ),
        scratch_shapes=[pltpu.VMEM((k, D), jnp.float32)],             # top / x_big_lambda
    )

    out, attn = pl.pallas_call(
        _encoder_layer_kernel,
        out_shape=(
            jax.ShapeDtypeStruct((B, N, D), x.dtype),
            jax.ShapeDtypeStruct((B, k, N), x.dtype),
        ),
        grid_spec=grid_spec,
        compiler_params=pltpu.CompilerParams(
            dimension_semantics=("parallel",),           # bags split across TCs (v7x)
            vmem_limit_bytes=48 * 1024 * 1024,           # explicit budget, < v7x 64 MiB
        ),
    )(idx, x, g1, b1, g2, b2, w1, fb1, w2, fb2)
    return out, attn


def _reference(x, c, params, *, big_lambda):
    """Pure-JAX reference of the same forward (mirrors the kernel's bf16 MXU casts)."""
    B, N, D = x.shape
    ln1_g, ln1_b, ln2_g, ln2_b, ff_w1, ff_b1, ff_w2, ff_b2 = params
    k = big_lambda
    scale = 1.0 / math.sqrt(D)
    bf16, f32 = jnp.bfloat16, jnp.float32
    w1 = ff_w1.astype(bf16)
    w2 = ff_w2.astype(bf16)

    def ln(v, g, b):
        mu = v.mean(-1, keepdims=True)
        var = jnp.square(v - mu).mean(-1, keepdims=True)
        return (v - mu) * lax.rsqrt(var + _LN_EPS) * g + b

    _, idx = lax.top_k(c[..., 0], k)                             # (B, k)
    xn = ln(x, ln1_g, ln1_b)
    top = jnp.take_along_axis(x, idx[..., None], axis=1)         # (B, k, D) un-normalized
    scores = jnp.einsum("bkd,bnd->bkn", (top * scale).astype(bf16), xn.astype(bf16),
                        preferred_element_type=f32)
    attn = jax.nn.softmax(scores, axis=-1)
    attn_out = jnp.einsum("bkn,bnd->bkd", attn.astype(bf16), xn.astype(bf16),
                          preferred_element_type=f32)
    # y = x.clone(); y[:, idx, :] = top + attn_out
    y = x.at[jnp.arange(B)[:, None], idx, :].set(top + attn_out)
    yn = ln(y, ln2_g, ln2_b)
    h = jnp.maximum(jnp.einsum("bnd,dh->bnh", yn.astype(bf16), w1,
                               preferred_element_type=f32) + ff_b1, 0.0)
    ff = jnp.einsum("bnh,hd->bnd", h.astype(bf16), w2,
                    preferred_element_type=f32) + ff_b2
    return y + ff, attn


if __name__ == "__main__":
    B, N, D, H = 2, 16, 128, 256      # bags, bag size, feature dim (lane-dense), FF hidden
    BIG_LAMBDA = 8                    # number of selected critical patches per bag

    key = jax.random.PRNGKey(0)
    ks = jax.random.split(key, 10)
    x = jax.random.normal(ks[0], (B, N, D), dtype=jnp.float32)
    c = jax.random.normal(ks[1], (B, N, 1), dtype=jnp.float32)

    ln1_g = 1.0 + 0.1 * jax.random.normal(ks[2], (D,), dtype=jnp.float32)
    ln1_b = 0.1 * jax.random.normal(ks[3], (D,), dtype=jnp.float32)
    ln2_g = 1.0 + 0.1 * jax.random.normal(ks[4], (D,), dtype=jnp.float32)
    ln2_b = 0.1 * jax.random.normal(ks[5], (D,), dtype=jnp.float32)

    bd = 1.0 / math.sqrt(D)
    bh = 1.0 / math.sqrt(H)
    ff_w1 = jax.random.uniform(ks[6], (D, H), minval=-bd, maxval=bd, dtype=jnp.float32)
    ff_b1 = jax.random.uniform(ks[7], (H,), minval=-bd, maxval=bd, dtype=jnp.float32)
    ff_w2 = jax.random.uniform(ks[8], (H, D), minval=-bh, maxval=bh, dtype=jnp.float32)
    ff_b2 = jax.random.uniform(ks[9], (D,), minval=-bh, maxval=bh, dtype=jnp.float32)

    params = (ln1_g, ln1_b, ln2_g, ln2_b, ff_w1, ff_b1, ff_w2, ff_b2)

    out, attn = encoder_layer_forward(x, c, params, big_lambda=BIG_LAMBDA)
    out = jax.block_until_ready(out)
    attn = jax.block_until_ready(attn)

    ref_out, ref_attn = _reference(x, c, params, big_lambda=BIG_LAMBDA)
    assert out.shape == (B, N, D) and attn.shape == (B, BIG_LAMBDA, N)
    # tolerance covers bf16 MXU operands + approximate EUP reciprocal in the kernel
    assert jnp.allclose(out, ref_out, atol=2e-2, rtol=2e-2)
    assert jnp.allclose(attn, ref_attn, atol=2e-2, rtol=2e-2)

    print("KERNEL_OK")
</pallas_src>

<mosaic_0001>
module attributes {stable_mosaic.version = 11 : i64} {
  func.func @_encoder_layer_kernel(%arg0: i32, %arg1: memref<2x8xi32, #tpu.memory_space<smem>>, %arg2: memref<1x16x128xf32, #tpu.memory_space<vmem>>, %arg3: memref<1x128xf32, #tpu.memory_space<vmem>>, %arg4: memref<1x128xf32, #tpu.memory_space<vmem>>, %arg5: memref<1x128xf32, #tpu.memory_space<vmem>>, %arg6: memref<1x128xf32, #tpu.memory_space<vmem>>, %arg7: memref<128x256xbf16, #tpu.memory_space<vmem>>, %arg8: memref<1x256xf32, #tpu.memory_space<vmem>>, %arg9: memref<256x128xbf16, #tpu.memory_space<vmem>>, %arg10: memref<1x128xf32, #tpu.memory_space<vmem>>, %arg11: memref<1x16x128xf32, #tpu.memory_space<vmem>>, %arg12: memref<1x8x16xf32, #tpu.memory_space<vmem>>, %arg13: memref<8x128xf32, #tpu.memory_space<vmem>>) attributes {dimension_semantics = [#tpu.dimension_semantics<parallel>], iteration_bounds = array<i64: 2>, scalar_prefetch = 1 : i64, scratch_operands = 1 : i64, tpu.core_type = #tpu.core_type<tc>, window_params = [{transform_indices = @transform_0, window_bounds = array<i64: 1, 16, 128>}, {pipeline_mode = #tpu.pipeline_mode<synchronous>, transform_indices = @transform_1, window_bounds = array<i64: 1, 128>}, {pipeline_mode = #tpu.pipeline_mode<synchronous>, transform_indices = @transform_2, window_bounds = array<i64: 1, 128>}, {pipeline_mode = #tpu.pipeline_mode<synchronous>, transform_indices = @transform_3, window_bounds = array<i64: 1, 128>}, {pipeline_mode = #tpu.pipeline_mode<synchronous>, transform_indices = @transform_4, window_bounds = array<i64: 1, 128>}, {pipeline_mode = #tpu.pipeline_mode<synchronous>, transform_indices = @transform_5, window_bounds = array<i64: 128, 256>}, {pipeline_mode = #tpu.pipeline_mode<synchronous>, transform_indices = @transform_6, window_bounds = array<i64: 1, 256>}, {pipeline_mode = #tpu.pipeline_mode<synchronous>, transform_indices = @transform_7, window_bounds = array<i64: 256, 128>}, {pipeline_mode = #tpu.pipeline_mode<synchronous>, transform_indices = @transform_8, window_bounds = array<i64: 1, 128>}, {transform_indices = @transform_9, window_bounds = array<i64: 1, 16, 128>}, {transform_indices = @transform_10, window_bounds = array<i64: 1, 8, 16>}]} {
    %c0 = arith.constant 0 : index
    %c0_0 = arith.constant 0 : index
    %c0_1 = arith.constant 0 : index
    %0 = vector.load %arg2[%c0, %c0_0, %c0_1] : memref<1x16x128xf32, #tpu.memory_space<vmem>>, vector<1x16x128xf32>
    %1 = vector.shape_cast %0 : vector<1x16x128xf32> to vector<16x128xf32>
    %c0_i32 = arith.constant 0 : i32
    %c8_i32 = arith.constant 8 : i32
    %2 = arith.addi %c0_i32, %c8_i32 : i32
    %c1_i32 = arith.constant 1 : i32
    scf.for %arg14 = %c0_i32 to %2 step %c1_i32  : i32 {
      %98 = arith.index_cast %arg0 : i32 to index
      %99 = arith.index_cast %arg14 : i32 to index
      %100 = memref.load %arg1[%98, %99] : memref<2x8xi32, #tpu.memory_space<smem>>
      %c0_56 = arith.constant 0 : index
      %101 = arith.index_cast %100 : i32 to index
      %c0_57 = arith.constant 0 : index
      %102 = vector.load %arg2[%c0_56, %101, %c0_57] : memref<1x16x128xf32, #tpu.memory_space<vmem>>, vector<1x1x128xf32>
      %103 = vector.shape_cast %102 : vector<1x1x128xf32> to vector<1x128xf32>
      %104 = arith.index_cast %arg14 : i32 to index
      %c0_58 = arith.constant 0 : index
      %105 = vector.load %arg13[%104, %c0_58] : memref<8x128xf32, #tpu.memory_space<vmem>>, vector<1x128xf32>
      tpu.vector_store %arg13[%104, %c0_58], %103 {strides = array<i32>} : memref<8x128xf32, #tpu.memory_space<vmem>>, vector<1x128xf32>,
    }
    %c8_i32_2 = arith.constant 8 : i32
    %c0_3 = arith.constant 0 : index
    %c0_4 = arith.constant 0 : index
    %3 = vector.load %arg13[%c0_3, %c0_4] : memref<8x128xf32, #tpu.memory_space<vmem>>, vector<8x128xf32>
    %c0_5 = arith.constant 0 : index
    %c0_6 = arith.constant 0 : index
    %4 = vector.load %arg3[%c0_5, %c0_6] : memref<1x128xf32, #tpu.memory_space<vmem>>, vector<1x128xf32>
    %c0_7 = arith.constant 0 : index
    %c0_8 = arith.constant 0 : index
    %5 = vector.load %arg4[%c0_7, %c0_8] : memref<1x128xf32, #tpu.memory_space<vmem>>, vector<1x128xf32>
    %cst = arith.constant dense<0.000000e+00> : vector<16xf32>
    %6 = vector.multi_reduction <add>, %1, %cst [1] : vector<16x128xf32> to vector<16xf32>
    %7 = vector.shape_cast %6 : vector<16xf32> to vector<16x1xf32>
    %cst_9 = arith.constant 1.280000e+02 : f32
    %8 = vector.broadcast %cst_9 : f32 to vector<16x1xf32>
    %9 = arith.divf %7, %8 : vector<16x1xf32>
    %10 = vector.broadcast %9 : vector<16x1xf32> to vector<16x128xf32>
    %11 = arith.subf %1, %10 : vector<16x128xf32>
    %12 = arith.mulf %11, %11 : vector<16x128xf32>
    %cst_10 = arith.constant dense<0.000000e+00> : vector<16xf32>
    %13 = vector.multi_reduction <add>, %12, %cst_10 [1] : vector<16x128xf32> to vector<16xf32>
    %14 = vector.shape_cast %13 : vector<16xf32> to vector<16x1xf32>
    %cst_11 = arith.constant 1.280000e+02 : f32
    %15 = vector.broadcast %cst_11 : f32 to vector<16x1xf32>
    %16 = arith.divf %14, %15 : vector<16x1xf32>
    %17 = vector.broadcast %9 : vector<16x1xf32> to vector<16x128xf32>
    %18 = arith.subf %1, %17 : vector<16x128xf32>
    %cst_12 = arith.constant 9.99999974E-6 : f32
    %19 = vector.broadcast %cst_12 : f32 to vector<16x1xf32>
    %20 = arith.addf %16, %19 : vector<16x1xf32>
    %21 = math.rsqrt %20 : vector<16x1xf32>
    %22 = vector.broadcast %21 : vector<16x1xf32> to vector<16x128xf32>
    %23 = arith.mulf %18, %22 : vector<16x128xf32>
    %24 = vector.broadcast %4 : vector<1x128xf32> to vector<16x128xf32>
    %25 = arith.mulf %23, %24 : vector<16x128xf32>
    %26 = vector.broadcast %5 : vector<1x128xf32> to vector<16x128xf32>
    %27 = arith.addf %25, %26 : vector<16x128xf32>
    %28 = arith.truncf %27 : vector<16x128xf32> to vector<16x128xbf16>
    %cst_13 = arith.constant 0.0883883461 : f32
    %29 = vector.broadcast %cst_13 : f32 to vector<8x128xf32>
    %30 = arith.mulf %3, %29 : vector<8x128xf32>
    %31 = arith.truncf %30 : vector<8x128xf32> to vector<8x128xbf16>
    %cst_14 = arith.constant dense<0.000000e+00> : vector<8x16xf32>
    %32 = tpu.matmul %31, %28, %cst_14 {dimension_numbers = #tpu.dot_dimension_numbers<[1], [1], [0], [0], [0, 0, 1, 0], [], []>} : vector<8x128xbf16>, vector<16x128xbf16>, vector<8x16xf32> -> vector<8x16xf32>
    %cst_15 = arith.constant dense<0xFF800000> : vector<8xf32>
    %33 = vector.multi_reduction <maximumf>, %32, %cst_15 [1] : vector<8x16xf32> to vector<8xf32>
    %34 = vector.shape_cast %33 : vector<8xf32> to vector<8x1xf32>
    %35 = vector.broadcast %34 : vector<8x1xf32> to vector<8x16xf32>
    %36 = arith.subf %32, %35 : vector<8x16xf32>
    %37 = math.exp %36 : vector<8x16xf32>
    %cst_16 = arith.constant dense<0.000000e+00> : vector<8xf32>
    %38 = vector.multi_reduction <add>, %37, %cst_16 [1] : vector<8x16xf32> to vector<8xf32>
    %39 = vector.shape_cast %38 : vector<8xf32> to vector<8x1xf32>
    %40 = tpu.reciprocal %39 {approx = true} : vector<8x1xf32> -> vector<8x1xf32>
    %41 = vector.broadcast %40 : vector<8x1xf32> to vector<8x16xf32>
    %42 = arith.mulf %37, %41 : vector<8x16xf32>
    %43 = arith.truncf %42 : vector<8x16xf32> to vector<8x16xbf16>
    %cst_17 = arith.constant dense<0.000000e+00> : vector<8x128xf32>
    %44 = tpu.matmul %43, %28, %cst_17 {dimension_numbers = #tpu.dot_dimension_numbers<[1], [0], [0], [1], [0, 0, 1, 1], [], []>} : vector<8x16xbf16>, vector<16x128xbf16>, vector<8x128xf32> -> vector<8x128xf32>
    %45 = arith.addf %3, %44 : vector<8x128xf32>
    %c0_18 = arith.constant 0 : index
    %c0_19 = arith.constant 0 : index
    %46 = vector.load %arg13[%c0_18, %c0_19] : memref<8x128xf32, #tpu.memory_space<vmem>>, vector<8x128xf32>
    tpu.vector_store %arg13[%c0_18, %c0_19], %45 {strides = array<i32>} : memref<8x128xf32, #tpu.memory_space<vmem>>, vector<8x128xf32>,
    %c0_20 = arith.constant 0 : index
    %c0_21 = arith.constant 0 : index
    %c0_22 = arith.constant 0 : index
    %47 = vector.load %arg11[%c0_20, %c0_21, %c0_22] : memref<1x16x128xf32, #tpu.memory_space<vmem>>, vector<1x16x128xf32>
    %48 = vector.shape_cast %47 : vector<1x16x128xf32> to vector<16x128xf32>
    %49 = vector.shape_cast %1 : vector<16x128xf32> to vector<1x16x128xf32>
    tpu.vector_store %arg11[%c0_20, %c0_21, %c0_22], %49 {strides = array<i32>} : memref<1x16x128xf32, #tpu.memory_space<vmem>>, vector<1x16x128xf32>,
    %c0_i32_23 = arith.constant 0 : i32
    %c8_i32_24 = arith.constant 8 : i32
    %50 = arith.addi %c0_i32_23, %c8_i32_24 : i32
    %c1_i32_25 = arith.constant 1 : i32
    scf.for %arg14 = %c0_i32_23 to %50 step %c1_i32_25  : i32 {
      %98 = arith.index_cast %arg0 : i32 to index
      %99 = arith.index_cast %arg14 : i32 to index
      %100 = memref.load %arg1[%98, %99] : memref<2x8xi32, #tpu.memory_space<smem>>
      %101 = arith.index_cast %arg14 : i32 to index
      %c0_56 = arith.constant 0 : index
      %102 = vector.load %arg13[%101, %c0_56] : memref<8x128xf32, #tpu.memory_space<vmem>>, vector<1x128xf32>
      %c0_57 = arith.constant 0 : index
      %103 = arith.index_cast %100 : i32 to index
      %c0_58 = arith.constant 0 : index
      %104 = vector.load %arg11[%c0_57, %103, %c0_58] : memref<1x16x128xf32, #tpu.memory_space<vmem>>, vector<1x1x128xf32>
      %105 = vector.shape_cast %104 : vector<1x1x128xf32> to vector<1x128xf32>
      %106 = vector.shape_cast %102 : vector<1x128xf32> to vector<1x1x128xf32>
      tpu.vector_store %arg11[%c0_57, %103, %c0_58], %106 {strides = array<i32>} : memref<1x16x128xf32, #tpu.memory_space<vmem>>, vector<1x1x128xf32>,
    }
    %c8_i32_26 = arith.constant 8 : i32
    %c0_27 = arith.constant 0 : index
    %c0_28 = arith.constant 0 : index
    %c0_29 = arith.constant 0 : index
    %51 = vector.load %arg11[%c0_27, %c0_28, %c0_29] : memref<1x16x128xf32, #tpu.memory_space<vmem>>, vector<1x16x128xf32>
    %52 = vector.shape_cast %51 : vector<1x16x128xf32> to vector<16x128xf32>
    %c0_30 = arith.constant 0 : index
    %c0_31 = arith.constant 0 : index
    %53 = vector.load %arg5[%c0_30, %c0_31] : memref<1x128xf32, #tpu.memory_space<vmem>>, vector<1x128xf32>
    %c0_32 = arith.constant 0 : index
    %c0_33 = arith.constant 0 : index
    %54 = vector.load %arg6[%c0_32, %c0_33] : memref<1x128xf32, #tpu.memory_space<vmem>>, vector<1x128xf32>
    %cst_34 = arith.constant dense<0.000000e+00> : vector<16xf32>
    %55 = vector.multi_reduction <add>, %52, %cst_34 [1] : vector<16x128xf32> to vector<16xf32>
    %56 = vector.shape_cast %55 : vector<16xf32> to vector<16x1xf32>
    %cst_35 = arith.constant 1.280000e+02 : f32
    %57 = vector.broadcast %cst_35 : f32 to vector<16x1xf32>
    %58 = arith.divf %56, %57 : vector<16x1xf32>
    %59 = vector.broadcast %58 : vector<16x1xf32> to vector<16x128xf32>
    %60 = arith.subf %52, %59 : vector<16x128xf32>
    %61 = arith.mulf %60, %60 : vector<16x128xf32>
    %cst_36 = arith.constant dense<0.000000e+00> : vector<16xf32>
    %62 = vector.multi_reduction <add>, %61, %cst_36 [1] : vector<16x128xf32> to vector<16xf32>
    %63 = vector.shape_cast %62 : vector<16xf32> to vector<16x1xf32>
    %cst_37 = arith.constant 1.280000e+02 : f32
    %64 = vector.broadcast %cst_37 : f32 to vector<16x1xf32>
    %65 = arith.divf %63, %64 : vector<16x1xf32>
    %66 = vector.broadcast %58 : vector<16x1xf32> to vector<16x128xf32>
    %67 = arith.subf %52, %66 : vector<16x128xf32>
    %cst_38 = arith.constant 9.99999974E-6 : f32
    %68 = vector.broadcast %cst_38 : f32 to vector<16x1xf32>
    %69 = arith.addf %65, %68 : vector<16x1xf32>
    %70 = math.rsqrt %69 : vector<16x1xf32>
    %71 = vector.broadcast %70 : vector<16x1xf32> to vector<16x128xf32>
    %72 = arith.mulf %67, %71 : vector<16x128xf32>
    %73 = vector.broadcast %53 : vector<1x128xf32> to vector<16x128xf32>
    %74 = arith.mulf %72, %73 : vector<16x128xf32>
    %75 = vector.broadcast %54 : vector<1x128xf32> to vector<16x128xf32>
    %76 = arith.addf %74, %75 : vector<16x128xf32>
    %77 = arith.truncf %76 : vector<16x128xf32> to vector<16x128xbf16>
    %c0_39 = arith.constant 0 : index
    %c0_40 = arith.constant 0 : index
    %78 = vector.load %arg7[%c0_39, %c0_40] : memref<128x256xbf16, #tpu.memory_space<vmem>>, vector<128x256xbf16>
    %cst_41 = arith.constant dense<0.000000e+00> : vector<16x256xf32>
    %79 = tpu.matmul %77, %78, %cst_41 {dimension_numbers = #tpu.dot_dimension_numbers<[1], [0], [0], [1], [0, 0, 1, 1], [], []>} : vector<16x128xbf16>, vector<128x256xbf16>, vector<16x256xf32> -> vector<16x256xf32>
    %c0_42 = arith.constant 0 : index
    %c0_43 = arith.constant 0 : index
    %80 = vector.load %arg8[%c0_42, %c0_43] : memref<1x256xf32, #tpu.memory_space<vmem>>, vector<1x256xf32>
    %81 = vector.broadcast %80 : vector<1x256xf32> to vector<16x256xf32>
    %82 = arith.addf %79, %81 : vector<16x256xf32>
    %cst_44 = arith.constant 0.000000e+00 : f32
    %83 = vector.broadcast %cst_44 : f32 to vector<16x256xf32>
    %84 = arith.maximumf %82, %83 : vector<16x256xf32>
    %85 = arith.truncf %84 : vector<16x256xf32> to vector<16x256xbf16>
    %c0_45 = arith.constant 0 : index
    %c0_46 = arith.constant 0 : index
    %86 = vector.load %arg9[%c0_45, %c0_46] : memref<256x128xbf16, #tpu.memory_space<vmem>>, vector<256x128xbf16>
    %cst_47 = arith.constant dense<0.000000e+00> : vector<16x128xf32>
    %87 = tpu.matmul %85, %86, %cst_47 {dimension_numbers = #tpu.dot_dimension_numbers<[1], [0], [0], [1], [0, 0, 1, 1], [], []>} : vector<16x256xbf16>, vector<256x128xbf16>, vector<16x128xf32> -> vector<16x128xf32>
    %c0_48 = arith.constant 0 : index
    %c0_49 = arith.constant 0 : index
    %88 = vector.load %arg10[%c0_48, %c0_49] : memref<1x128xf32, #tpu.memory_space<vmem>>, vector<1x128xf32>
    %89 = vector.broadcast %88 : vector<1x128xf32> to vector<16x128xf32>
    %90 = arith.addf %87, %89 : vector<16x128xf32>
    %91 = arith.addf %52, %90 : vector<16x128xf32>
    %c0_50 = arith.constant 0 : index
    %c0_51 = arith.constant 0 : index
    %c0_52 = arith.constant 0 : index
    %92 = vector.load %arg11[%c0_50, %c0_51, %c0_52] : memref<1x16x128xf32, #tpu.memory_space<vmem>>, vector<1x16x128xf32>
    %93 = vector.shape_cast %92 : vector<1x16x128xf32> to vector<16x128xf32>
    %94 = vector.shape_cast %91 : vector<16x128xf32> to vector<1x16x128xf32>
    tpu.vector_store %arg11[%c0_50, %c0_51, %c0_52], %94 {strides = array<i32>} : memref<1x16x128xf32, #tpu.memory_space<vmem>>, vector<1x16x128xf32>,
    %c0_53 = arith.constant 0 : index
    %c0_54 = arith.constant 0 : index
    %c0_55 = arith.constant 0 : index
    %95 = vector.load %arg12[%c0_53, %c0_54, %c0_55] : memref<1x8x16xf32, #tpu.memory_space<vmem>>, vector<1x8x16xf32>
    %96 = vector.shape_cast %95 : vector<1x8x16xf32> to vector<8x16xf32>
    %97 = vector.shape_cast %42 : vector<8x16xf32> to vector<1x8x16xf32>
    tpu.vector_store %arg12[%c0_53, %c0_54, %c0_55], %97 {strides = array<i32>} : memref<1x8x16xf32, #tpu.memory_space<vmem>>, vector<1x8x16xf32>,
    return
  }
  func.func @transform_0(%arg0: i32, %arg1: memref<2x8xi32, #tpu.memory_space<smem>>) -> (i32, i32, i32) {
    %c0_i32 = arith.constant 0 : i32
    %c0_i32_0 = arith.constant 0 : i32
    %c0_i32_1 = arith.constant 0 : i32
    return %arg0, %c0_i32, %c0_i32_0 : i32, i32, i32
  }
  func.func @transform_1(%arg0: i32, %arg1: memref<2x8xi32, #tpu.memory_space<smem>>) -> (i32, i32) {
    %c0_i32 = arith.constant 0 : i32
    %c0_i32_0 = arith.constant 0 : i32
    %c0_i32_1 = arith.constant 0 : i32
    return %c0_i32, %c0_i32_0 : i32, i32
  }
  func.func @transform_2(%arg0: i32, %arg1: memref<2x8xi32, #tpu.memory_space<smem>>) -> (i32, i32) {
    %c0_i32 = arith.constant 0 : i32
    %c0_i32_0 = arith.constant 0 : i32
    %c0_i32_1 = arith.constant 0 : i32
    return %c0_i32, %c0_i32_0 : i32, i32
  }
  func.func @transform_3(%arg0: i32, %arg1: memref<2x8xi32, #tpu.memory_space<smem>>) -> (i32, i32) {
    %c0_i32 = arith.constant 0 : i32
    %c0_i32_0 = arith.constant 0 : i32
    %c0_i32_1 = arith.constant 0 : i32
    return %c0_i32, %c0_i32_0 : i32, i32
  }
  func.func @transform_4(%arg0: i32, %arg1: memref<2x8xi32, #tpu.memory_space<smem>>) -> (i32, i32) {
    %c0_i32 = arith.constant 0 : i32
    %c0_i32_0 = arith.constant 0 : i32
    %c0_i32_1 = arith.constant 0 : i32
    return %c0_i32, %c0_i32_0 : i32, i32
  }
  func.func @transform_5(%arg0: i32, %arg1: memref<2x8xi32, #tpu.memory_space<smem>>) -> (i32, i32) {
    %c0_i32 = arith.constant 0 : i32
    %c0_i32_0 = arith.constant 0 : i32
    %c0_i32_1 = arith.constant 0 : i32
    return %c0_i32, %c0_i32_0 : i32, i32
  }
  func.func @transform_6(%arg0: i32, %arg1: memref<2x8xi32, #tpu.memory_space<smem>>) -> (i32, i32) {
    %c0_i32 = arith.constant 0 : i32
    %c0_i32_0 = arith.constant 0 : i32
    %c0_i32_1 = arith.constant 0 : i32
    return %c0_i32, %c0_i32_0 : i32, i32
  }
  func.func @transform_7(%arg0: i32, %arg1: memref<2x8xi32, #tpu.memory_space<smem>>) -> (i32, i32) {
    %c0_i32 = arith.constant 0 : i32
    %c0_i32_0 = arith.constant 0 : i32
    %c0_i32_1 = arith.constant 0 : i32
    return %c0_i32, %c0_i32_0 : i32, i32
  }
  func.func @transform_8(%arg0: i32, %arg1: memref<2x8xi32, #tpu.memory_space<smem>>) -> (i32, i32) {
    %c0_i32 = arith.constant 0 : i32
    %c0_i32_0 = arith.constant 0 : i32
    %c0_i32_1 = arith.constant 0 : i32
    return %c0_i32, %c0_i32_0 : i32, i32
  }
  func.func @transform_9(%arg0: i32, %arg1: memref<2x8xi32, #tpu.memory_space<smem>>) -> (i32, i32, i32) {
    %c0_i32 = arith.constant 0 : i32
    %c0_i32_0 = arith.constant 0 : i32
    %c0_i32_1 = arith.constant 0 : i32
    return %arg0, %c0_i32, %c0_i32_0 : i32, i32, i32
  }
  func.func @transform_10(%arg0: i32, %arg1: memref<2x8xi32, #tpu.memory_space<smem>>) -> (i32, i32, i32) {
    %c0_i32 = arith.constant 0 : i32
    %c0_i32_0 = arith.constant 0 : i32
    %c0_i32_1 = arith.constant 0 : i32
    return %arg0, %c0_i32, %c0_i32_0 : i32, i32, i32
  }
}

</mosaic_0001>

<llo_original>
// kernel: tpu_custom_call.1
$region0: #{tpu_custom_call.1}
  #allocation0 [shape = 'u32[]', space=smem, size = 0x4, offset = 0x4, fixed_abs, tag = 'smem constant byte address 0x4 - core index']
  #allocation1 [shape = 'u32[144,128]{1,0:T(1,128)}', space=vmem, size = 0x12000, scoped, tag = 'internal scratch']
  #allocation2 [shape = 'f32[8,128]{1,0:T(8,128)}', space=vmem, size = 0x1000, scoped, tag = 'scratch operand']
  #allocation3 [shape = 's32[1]{0}', space=sflag, size = 0x4, scoped, tag = 'scoped memory for tpu_custom_call.1']
  #allocation4 [shape = 'u8[1024]{0}', space=smem, size = 0x400, scoped, tag = 'prefetched SMEM operand 0']
  %s0 = inlined_call_operand.hbm [shape: s32[2,8], index: 0, kind: input, shape index: {}]
  %s1 = inlined_call_operand.hbm [shape: f32[2,16,128], index: 1, kind: input, shape index: {}]
  %s2 = inlined_call_operand.vmem [shape: f32[1,128], index: 2, kind: input, shape index: {}]
  %s3 = inlined_call_operand.vmem [shape: f32[1,128], index: 3, kind: input, shape index: {}]
  %s4 = inlined_call_operand.vmem [shape: f32[1,128], index: 4, kind: input, shape index: {}]
  %s5 = inlined_call_operand.vmem [shape: f32[1,128], index: 5, kind: input, shape index: {}]
  %s6 = inlined_call_operand.hbm [shape: bf16[128,256], index: 6, kind: input, shape index: {}]
  %s7 = inlined_call_operand.vmem [shape: f32[1,256], index: 7, kind: input, shape index: {}]
  %s8 = inlined_call_operand.hbm [shape: bf16[256,128], index: 8, kind: input, shape index: {}]
  %s9 = inlined_call_operand.vmem [shape: f32[1,128], index: 9, kind: input, shape index: {}]
  %s10 = inlined_call_operand.hbm [shape: f32[2,16,128], index: 10, kind: output, shape index: {0}]
  %s11 = inlined_call_operand.hbm [shape: f32[2,8,16], index: 11, kind: output, shape index: {1}]
  %12 = xla_tuple %s10, %s11
  %s13 = sld [smem:[#allocation0]]
  $region103: #{tpu_custom_call.1} parent=0
    _
  %s15 = ssub.s32 1, %s13
  %s16 = scalar_select 0, %s15, %s13
  %18 = dma.hbm_to_smem %s0, 32, [#allocation4], [#allocation3]
  %19 = dma.done [#allocation3], 32
  %20 = sfence
  $region1: #{tpu_custom_call.1} parent=0
    #allocation5 [shape = 'u8[16384]{0}', space=vmem, size = 0x4000, scoped, tag = 'input window, operand 1']
    #allocation6 [shape = 's32[2]{0}', space=sflag, size = 0x8, scoped, tag = 'scoped memory for tpu_custom_call.1']
    #allocation7 [shape = 's32[2]{0}', space=sflag, size = 0x8, scoped, tag = 'scoped memory for tpu_custom_call.1']
    #allocation8 [shape = 'u8[65536]{0}', space=vmem, size = 0x10000, scoped, tag = 'input window, operand 6, single buffered']
    #allocation9 [shape = 's32[1]{0}', space=sflag, size = 0x4, scoped, tag = 'scoped memory for tpu_custom_call.1']
    #allocation10 [shape = 'u8[65536]{0}', space=vmem, size = 0x10000, scoped, tag = 'input window, operand 8, single buffered']
    #allocation11 [shape = 'u8[16384]{0}', space=vmem, size = 0x4000, scoped, tag = 'output window, operand 0']
    #allocation12 [shape = 'u8[8192]{0}', space=vmem, size = 0x2000, scoped, tag = 'output window, operand 1']
    #allocation13 [shape = 's32[2]{0}', space=sflag, size = 0x8, scoped, tag = 'scoped memory for tpu_custom_call.1']
    %21 = vsyncpa [#allocation6], 0
    %s22 = scalar_lea.sflag [#allocation6], 1
    %23 = vsyncpa %s22, 0
    %24 = vsyncpa [#allocation9], 0
    %25 = vsyncpa [#allocation7], 0
    %s26 = scalar_lea.sflag [#allocation7], 1
    %27 = vsyncpa %s26, 0
    %28 = vsyncpa [#allocation13], 0
    %s29 = scalar_lea.sflag [#allocation13], 1
    %30 = vsyncpa %s29, 0
    loop: start=0, step=1, limit=4
    $region2: #{tpu_custom_call.1} parent=1 // loop_pre_header
      _
    $region3: #{tpu_custom_call.1} parent=1 // loop_header
      %s32 = sphi 0, %s36
      %p33 = scmp.ge.s32.totalorder %s32, 4
      %s42 = sphi 0, %s44
      %s45 = sphi 0, %s42
      %s46 = sphi 0, %s45
      %s62 = sphi 0, %s46
      %s66 = sphi 0, %s66
      %s68 = sphi 0, %s66
      %s69 = sphi 0, %s68
      %s83 = sphi 0, %s69
      %s87 = sphi 0, %s87
      %s89 = sphi 0, %s87
      %s90 = sphi 0, %s89
      %s104 = sphi 0, %s90
      %s108 = sphi 0, %s108
      %s110 = sphi 0, %s108
      %s111 = sphi 0, %s110
      %s125 = sphi 0, %s111
      %s129 = sphi 0, %s129
      %s131 = sphi 0, %s129
      %s132 = sphi 0, %s131
      %s146 = sphi 0, %s132
      %s150 = sphi 0, %s150
      %s152 = sphi 0, %s150
      %s153 = sphi 0, %s152
      %s167 = sphi 0, %s153
      %s171 = sphi 0, %s171
      %s173 = sphi 0, %s171
      %s174 = sphi 0, %s173
      %s188 = sphi 0, %s174
      %s192 = sphi 0, %s192
      %s194 = sphi 0, %s192
      %s195 = sphi 0, %s194
      %s209 = sphi 0, %s195
      %s213 = sphi 0, %s213
      %s215 = sphi 0, %s213
      %s216 = sphi 0, %s215
      %s230 = sphi 0, %s216
      %s236 = sphi 0, %s238
      %s239 = sphi 0, %s236
      %s240 = sphi 0, %s239
      %s256 = sphi 0, %s240
      %s262 = sphi 0, %s264
      %s265 = sphi 0, %s262
      %s266 = sphi 0, %s265
      %s282 = sphi 0, %s266
    $region4: #{tpu_custom_call.1} parent=1 // loop_header_branch
      %35 = sbr.rel (%p33) target = $region8
    $region5: #{tpu_custom_call.1} parent=1 // loop_body
      %s37 = ssub.s32 %s32, 1
      %s38 = ssub.s32 %s32, 2
      %s39 = sadd.s32 %s32, 1
      %s40 = ssub.s32 %s32, %s39
      %p41 = scmp.eq.s32.totalorder %s40, 0
      %s43 = sadd.s32 %s42, 1
      %s44 = scalar_select %p41, %s42, %s43
      %p47 = pneg %p41
      %p48 = scmp.eq.s32.totalorder %s32, 1
      %p49 = por %p47, %p48
      %p50 = scmp.ne.s32.totalorder %s42, %s45
      %p51 = scmp.eq.s32.totalorder %s32, 0
      %p52 = por %p50, %p51
      %p53 = scmp.ne.s32.totalorder %s42, %s45
      %p54 = scmp.eq.s32.totalorder %s37, 1
      %p55 = por %p53, %p54
      %p56 = scmp.ne.s32.totalorder %s45, %s46
      %p57 = scmp.eq.s32.totalorder %s37, 0
      %p58 = por %p56, %p57
      %p59 = scmp.ne.s32.totalorder %s45, %s46
      %p60 = scmp.eq.s32.totalorder %s38, 1
      %p61 = por %p59, %p60
      %p63 = scmp.ne.s32.totalorder %s46, %s62
      %p64 = scmp.eq.s32.totalorder %s38, 0
      %p65 = por %p63, %p64
      %s67 = sadd.s32 %s66, 1
      %p70 = scmp.eq.s32.totalorder %s32, 1
      %p71 = scmp.ne.s32.totalorder %s66, %s68
      %p72 = scmp.eq.s32.totalorder %s32, 0
      %p73 = por %p71, %p72
      %p74 = scmp.ne.s32.totalorder %s66, %s68
      %p75 = scmp.eq.s32.totalorder %s37, 1
      %p76 = por %p74, %p75
      %p77 = scmp.ne.s32.totalorder %s68, %s69
      %p78 = scmp.eq.s32.totalorder %s37, 0
      %p79 = por %p77, %p78
      %p80 = scmp.ne.s32.totalorder %s68, %s69
      %p81 = scmp.eq.s32.totalorder %s38, 1
      %p82 = por %p80, %p81
      %p84 = scmp.ne.s32.totalorder %s69, %s83
      %p85 = scmp.eq.s32.totalorder %s38, 0
      %p86 = por %p84, %p85
      %s88 = sadd.s32 %s87, 1
      %p91 = scmp.eq.s32.totalorder %s32, 1
      %p92 = scmp.ne.s32.totalorder %s87, %s89
      %p93 = scmp.eq.s32.totalorder %s32, 0
      %p94 = por %p92, %p93
      %p95 = scmp.ne.s32.totalorder %s87, %s89
      %p96 = scmp.eq.s32.totalorder %s37, 1
      %p97 = por %p95, %p96
      %p98 = scmp.ne.s32.totalorder %s89, %s90
      %p99 = scmp.eq.s32.totalorder %s37, 0
      %p100 = por %p98, %p99
      %p101 = scmp.ne.s32.totalorder %s89, %s90
      %p102 = scmp.eq.s32.totalorder %s38, 1
      %p103 = por %p101, %p102
      %p105 = scmp.ne.s32.totalorder %s90, %s104
      %p106 = scmp.eq.s32.totalorder %s38, 0
      %p107 = por %p105, %p106
      %s109 = sadd.s32 %s108, 1
      %p112 = scmp.eq.s32.totalorder %s32, 1
      %p113 = scmp.ne.s32.totalorder %s108, %s110
      %p114 = scmp.eq.s32.totalorder %s32, 0
      %p115 = por %p113, %p114
      %p116 = scmp.ne.s32.totalorder %s108, %s110
      %p117 = scmp.eq.s32.totalorder %s37, 1
      %p118 = por %p116, %p117
      %p119 = scmp.ne.s32.totalorder %s110, %s111
      %p120 = scmp.eq.s32.totalorder %s37, 0
      %p121 = por %p119, %p120
      %p122 = scmp.ne.s32.totalorder %s110, %s111
      %p123 = scmp.eq.s32.totalorder %s38, 1
      %p124 = por %p122, %p123
      %p126 = scmp.ne.s32.totalorder %s111, %s125
      %p127 = scmp.eq.s32.totalorder %s38, 0
      %p128 = por %p126, %p127
      %s130 = sadd.s32 %s129, 1
      %p133 = scmp.eq.s32.totalorder %s32, 1
      %p134 = scmp.ne.s32.totalorder %s129, %s131
      %p135 = scmp.eq.s32.totalorder %s32, 0
      %p136 = por %p134, %p135
      %p137 = scmp.ne.s32.totalorder %s129, %s131
      %p138 = scmp.eq.s32.totalorder %s37, 1
      %p139 = por %p137, %p138
      %p140 = scmp.ne.s32.totalorder %s131, %s132
      %p141 = scmp.eq.s32.totalorder %s37, 0
      %p142 = por %p140, %p141
      %p143 = scmp.ne.s32.totalorder %s131, %s132
      %p144 = scmp.eq.s32.totalorder %s38, 1
      %p145 = por %p143, %p144
      %p147 = scmp.ne.s32.totalorder %s132, %s146
      %p148 = scmp.eq.s32.totalorder %s38, 0
      %p149 = por %p147, %p148
      %s151 = sadd.s32 %s150, 1
      %p154 = scmp.eq.s32.totalorder %s32, 1
      %p155 = scmp.ne.s32.totalorder %s150, %s152
      %p156 = scmp.eq.s32.totalorder %s32, 0
      %p157 = por %p155, %p156
      %p158 = scmp.ne.s32.totalorder %s150, %s152
      %p159 = scmp.eq.s32.totalorder %s37, 1
      %p160 = por %p158, %p159
      %p161 = scmp.ne.s32.totalorder %s152, %s153
      %p162 = scmp.eq.s32.totalorder %s37, 0
      %p163 = por %p161, %p162
      %p164 = scmp.ne.s32.totalorder %s152, %s153
      %p165 = scmp.eq.s32.totalorder %s38, 1
      %p166 = por %p164, %p165
      %p168 = scmp.ne.s32.totalorder %s153, %s167
      %p169 = scmp.eq.s32.totalorder %s38, 0
      %p170 = por %p168, %p169
      %s172 = sadd.s32 %s171, 1
      %p175 = scmp.eq.s32.totalorder %s32, 1
      %p176 = scmp.ne.s32.totalorder %s171, %s173
      %p177 = scmp.eq.s32.totalorder %s32, 0
      %p178 = por %p176, %p177
      %p179 = scmp.ne.s32.totalorder %s171, %s173
      %p180 = scmp.eq.s32.totalorder %s37, 1
      %p181 = por %p179, %p180
      %p182 = scmp.ne.s32.totalorder %s173, %s174
      %p183 = scmp.eq.s32.totalorder %s37, 0
      %p184 = por %p182, %p183
      %p185 = scmp.ne.s32.totalorder %s173, %s174
      %p186 = scmp.eq.s32.totalorder %s38, 1
      %p187 = por %p185, %p186
      %p189 = scmp.ne.s32.totalorder %s174, %s188
      %p190 = scmp.eq.s32.totalorder %s38, 0
      %p191 = por %p189, %p190
      %s193 = sadd.s32 %s192, 1
      %p196 = scmp.eq.s32.totalorder %s32, 1
      %p197 = scmp.ne.s32.totalorder %s192, %s194
      %p198 = scmp.eq.s32.totalorder %s32, 0
      %p199 = por %p197, %p198
      %p200 = scmp.ne.s32.totalorder %s192, %s194
      %p201 = scmp.eq.s32.totalorder %s37, 1
      %p202 = por %p200, %p201
      %p203 = scmp.ne.s32.totalorder %s194, %s195
      %p204 = scmp.eq.s32.totalorder %s37, 0
      %p205 = por %p203, %p204
      %p206 = scmp.ne.s32.totalorder %s194, %s195
      %p207 = scmp.eq.s32.totalorder %s38, 1
      %p208 = por %p206, %p207
      %p210 = scmp.ne.s32.totalorder %s195, %s209
      %p211 = scmp.eq.s32.totalorder %s38, 0
      %p212 = por %p210, %p211
      %s214 = sadd.s32 %s213, 1
      %p217 = scmp.eq.s32.totalorder %s32, 1
      %p218 = scmp.ne.s32.totalorder %s213, %s215
      %p219 = scmp.eq.s32.totalorder %s32, 0
      %p220 = por %p218, %p219
      %p221 = scmp.ne.s32.totalorder %s213, %s215
      %p222 = scmp.eq.s32.totalorder %s37, 1
      %p223 = por %p221, %p222
      %p224 = scmp.ne.s32.totalorder %s215, %s216
      %p225 = scmp.eq.s32.totalorder %s37, 0
      %p226 = por %p224, %p225
      %p227 = scmp.ne.s32.totalorder %s215, %s216
      %p228 = scmp.eq.s32.totalorder %s38, 1
      %p229 = por %p227, %p228
      %p231 = scmp.ne.s32.totalorder %s216, %s230
      %p232 = scmp.eq.s32.totalorder %s38, 0
      %p233 = por %p231, %p232
      %s234 = ssub.s32 %s32, %s39
      %p235 = scmp.eq.s32.totalorder %s234, 0
      %s237 = sadd.s32 %s236, 1
      %s238 = scalar_select %p235, %s236, %s237
      %p241 = pneg %p235
      %p242 = scmp.eq.s32.totalorder %s32, 1
      %p243 = por %p241, %p242
      %p244 = scmp.ne.s32.totalorder %s236, %s239
      %p245 = scmp.eq.s32.totalorder %s32, 0
      %p246 = por %p244, %p245
      %p247 = scmp.ne.s32.totalorder %s236, %s239
      %p248 = scmp.eq.s32.totalorder %s37, 1
      %p249 = por %p247, %p248
      %p250 = scmp.ne.s32.totalorder %s239, %s240
      %p251 = scmp.eq.s32.totalorder %s37, 0
      %p252 = por %p250, %p251
      %p253 = scmp.ne.s32.totalorder %s239, %s240
      %p254 = scmp.eq.s32.totalorder %s38, 1
      %p255 = por %p253, %p254
      %p257 = scmp.ne.s32.totalorder %s240, %s256
      %p258 = scmp.eq.s32.totalorder %s38, 0
      %p259 = por %p257, %p258
      %s260 = ssub.s32 %s32, %s39
      %p261 = scmp.eq.s32.totalorder %s260, 0
      %s263 = sadd.s32 %s262, 1
      %s264 = scalar_select %p261, %s262, %s263
      %p267 = pneg %p261
      %p268 = scmp.eq.s32.totalorder %s32, 1
      %p269 = por %p267, %p268
      %p270 = scmp.ne.s32.totalorder %s262, %s265
      %p271 = scmp.eq.s32.totalorder %s32, 0
      %p272 = por %p270, %p271
      %p273 = scmp.ne.s32.totalorder %s262, %s265
      %p274 = scmp.eq.s32.totalorder %s37, 1
      %p275 = por %p273, %p274
      %p276 = scmp.ne.s32.totalorder %s265, %s266
      %p277 = scmp.eq.s32.totalorder %s37, 0
      %p278 = por %p276, %p277
      %p279 = scmp.ne.s32.totalorder %s265, %s266
      %p280 = scmp.eq.s32.totalorder %s38, 1
      %p281 = por %p279, %p280
      %p283 = scmp.ne.s32.totalorder %s266, %s282
      %p284 = scmp.eq.s32.totalorder %s38, 0
      %p285 = por %p283, %p284
      %p286 = scmp.le.s32.totalorder 1, %s32
      %p287 = scmp.lt.s32.totalorder %s32, 3
      %p288 = pnand %p286, %p287
      %p289 = pneg %p288
      // Predicated region
      $region9: #{tpu_custom_call.1} parent=5 // pred_check
        _
      $region10: #{tpu_custom_call.1} parent=5 // pred_check_branch
        %291 = sbr.rel (%p288) target = $region12
      $region11: #{tpu_custom_call.1} parent=5 // pred_region
        %s292 = ssub.s32 %s32, 1
        // Predicated region
        $region13: #{tpu_custom_call.1} parent=11 // pred_check
          %p293 = pneg %p79
        $region14: #{tpu_custom_call.1} parent=11 // pred_check_branch
          %295 = sbr.rel (%p293) target = $region16
        $region15: #{tpu_custom_call.1} parent=11 // pred_region
          _
        $region16: #{tpu_custom_call.1} parent=11 // pred_fallthru
          _
        // Predicated region
        $region17: #{tpu_custom_call.1} parent=11 // pred_check
          %p296 = pneg %p100
        $region18: #{tpu_custom_call.1} parent=11 // pred_check_branch
          %298 = sbr.rel (%p296) target = $region20
        $region19: #{tpu_custom_call.1} parent=11 // pred_region
          _
        $region20: #{tpu_custom_call.1} parent=11 // pred_fallthru
          _
        // Predicated region
        $region21: #{tpu_custom_call.1} parent=11 // pred_check
          %p299 = pneg %p121
        $region22: #{tpu_custom_call.1} parent=11 // pred_check_branch
          %301 = sbr.rel (%p299) target = $region24
        $region23: #{tpu_custom_call.1} parent=11 // pred_region
          _
        $region24: #{tpu_custom_call.1} parent=11 // pred_fallthru
          _
        // Predicated region
        $region25: #{tpu_custom_call.1} parent=11 // pred_check
          %p302 = pneg %p142
        $region26: #{tpu_custom_call.1} parent=11 // pred_check_branch
          %304 = sbr.rel (%p302) target = $region28
        $region27: #{tpu_custom_call.1} parent=11 // pred_region
          _
        $region28: #{tpu_custom_call.1} parent=11 // pred_fallthru
          _
        // Predicated region
        $region29: #{tpu_custom_call.1} parent=11 // pred_check
          %p305 = pneg %p163
        $region30: #{tpu_custom_call.1} parent=11 // pred_check_branch
          %307 = sbr.rel (%p305) target = $region32
        $region31: #{tpu_custom_call.1} parent=11 // pred_region
          %s309 = ssub.s32 2048, 2048
          %310 = vsyncadd [#allocation9], %s309
          %s311 = sshll.u32 [#allocation8], 4
          %s312 = int_to_ptr.vmem [resolvable:$true] %s311
          %317 = dma.hbm_to_vmem [thread:$0]  %s6, 2048, %s312, [#allocation9], 128, 128, 8
        $region32: #{tpu_custom_call.1} parent=11 // pred_fallthru
          _
        // Predicated region
        $region33: #{tpu_custom_call.1} parent=11 // pred_check
          %p318 = pneg %p184
        $region34: #{tpu_custom_call.1} parent=11 // pred_check_branch
          %320 = sbr.rel (%p318) target = $region36
        $region35: #{tpu_custom_call.1} parent=11 // pred_region
          _
        $region36: #{tpu_custom_call.1} parent=11 // pred_fallthru
          _
        // Predicated region
        $region37: #{tpu_custom_call.1} parent=11 // pred_check
          %p321 = pneg %p205
        $region38: #{tpu_custom_call.1} parent=11 // pred_check_branch
          %323 = sbr.rel (%p321) target = $region40
        $region39: #{tpu_custom_call.1} parent=11 // pred_region
          %s325 = ssub.s32 2048, 2048
          %326 = vsyncadd [#allocation9], %s325
          %s327 = sshll.u32 [#allocation10], 4
          %s328 = int_to_ptr.vmem [resolvable:$true] %s327
          %333 = dma.hbm_to_vmem [thread:$0]  %s8, 2048, %s328, [#allocation9], 64, 64, 4
        $region40: #{tpu_custom_call.1} parent=11 // pred_fallthru
          _
        // Predicated region
        $region41: #{tpu_custom_call.1} parent=11 // pred_check
          %p334 = pneg %p226
        $region42: #{tpu_custom_call.1} parent=11 // pred_check_branch
          %336 = sbr.rel (%p334) target = $region44
        $region43: #{tpu_custom_call.1} parent=11 // pred_region
          _
        $region44: #{tpu_custom_call.1} parent=11 // pred_fallthru
          _
      $region12: #{tpu_custom_call.1} parent=5 // pred_fallthru
        _
      %p337 = scmp.lt.s32.totalorder %s32, 2
      // Predicated region
      $region45: #{tpu_custom_call.1} parent=5 // pred_check
        %p338 = pneg %p337
      $region46: #{tpu_custom_call.1} parent=5 // pred_check_branch
        %340 = sbr.rel (%p338) target = $region48
      $region47: #{tpu_custom_call.1} parent=5 // pred_region
        // Predicated region
        $region49: #{tpu_custom_call.1} parent=47 // pred_check
          %p341 = pneg %p52
        $region50: #{tpu_custom_call.1} parent=47 // pred_check_branch
          %343 = sbr.rel (%p341) target = $region52
        $region51: #{tpu_custom_call.1} parent=47 // pred_region
          %s344 = sand.u32 %s42, 1
          %s345 = scalar_lea.sflag [#allocation6], %s344
          %s346 = sand.u32 %s42, 1
          %s347 = smul.addr %s346, 16
          %s348 = scalar_lea.vmem [#allocation5], %s347
          %s350 = ssub.s32 256, 256
          %351 = vsyncadd %s345, %s350
          %s352 = smul.addr %s32, 2
          %s353 = smul.addr %s352, 128
          %s354 = scalar_lea.hbm %s1, %s353
          %s355 = sshll.u32 %s348, 4
          %s356 = int_to_ptr.vmem [resolvable:$true] %s355
          %361 = dma.hbm_to_vmem [thread:$0]  %s354, 256, %s356, %s345, 128, 128, 8
        $region52: #{tpu_custom_call.1} parent=47 // pred_fallthru
          _
      $region48: #{tpu_custom_call.1} parent=5 // pred_fallthru
        _
      %p362 = scmp.le.s32.totalorder 1, %s32
      %p363 = scmp.lt.s32.totalorder %s32, 3
      %p364 = pnand %p362, %p363
      %p365 = pneg %p364
      // Predicated region
      $region53: #{tpu_custom_call.1} parent=5 // pred_check
        _
      $region54: #{tpu_custom_call.1} parent=5 // pred_check_branch
        %367 = sbr.rel (%p364) target = $region56
      $region55: #{tpu_custom_call.1} parent=5 // pred_region
        %s368 = ssub.s32 %s32, 1
        %s369 = sand.u32 %s45, 1
        %s370 = scalar_lea.sflag [#allocation6], %s369
        %s371 = sand.u32 %s45, 1
        %s372 = smul.addr %s371, 16
        %s373 = scalar_lea.vmem [#allocation5], %s372
        // Predicated region
        $region57: #{tpu_custom_call.1} parent=55 // pred_check
          %p374 = pneg %p58
        $region58: #{tpu_custom_call.1} parent=55 // pred_check_branch
          %376 = sbr.rel (%p374) target = $region60
        $region59: #{tpu_custom_call.1} parent=55 // pred_region
          %377 = dma.done %s370, 256
        $region60: #{tpu_custom_call.1} parent=55 // pred_fallthru
          _
        // Predicated region
        $region61: #{tpu_custom_call.1} parent=55 // pred_check
          %p378 = pneg %p163
        $region62: #{tpu_custom_call.1} parent=55 // pred_check_branch
          %380 = sbr.rel (%p378) target = $region64
        $region63: #{tpu_custom_call.1} parent=55 // pred_region
          %381 = dma.done [#allocation9], 2048
        $region64: #{tpu_custom_call.1} parent=55 // pred_fallthru
          _
        // Predicated region
        $region65: #{tpu_custom_call.1} parent=55 // pred_check
          %p382 = pneg %p205
        $region66: #{tpu_custom_call.1} parent=55 // pred_check_branch
          %384 = sbr.rel (%p382) target = $region68
        $region67: #{tpu_custom_call.1} parent=55 // pred_region
          %385 = dma.done [#allocation9], 2048
        $region68: #{tpu_custom_call.1} parent=55 // pred_fallthru
          _
        %s386 = sand.u32 %s45, 1
        %s387 = scalar_lea.sflag [#allocation6], %s386
        %s388 = sand.u32 %s45, 1
        %s389 = smul.addr %s388, 16
        %s390 = scalar_lea.vmem [#allocation5], %s389
        %p391 = pneg %p58
        %p392 = pneg %p55
        %p393 = pneg %p79
        %p394 = pneg %p76
        %p395 = pneg %p100
        %p396 = pneg %p97
        %p397 = pneg %p121
        %p398 = pneg %p118
        %p399 = pneg %p142
        %p400 = pneg %p139
        %p401 = pneg %p163
        %p402 = pneg %p160
        %p403 = pneg %p184
        %p404 = pneg %p181
        %p405 = pneg %p205
        %p406 = pneg %p202
        %p407 = pneg %p226
        %p408 = pneg %p223
        %p409 = pneg %p252
        %p410 = pneg %p249
        %s411 = sand.u32 %s239, 1
        %s412 = scalar_lea.sflag [#allocation7], %s411
        %s413 = sand.u32 %s239, 1
        %s414 = smul.addr %s413, 16
        %s415 = scalar_lea.vmem [#allocation11], %s414
        %p416 = pneg %p278
        %p417 = pneg %p275
        %s418 = sand.u32 %s265, 1
        %s419 = scalar_lea.sflag [#allocation13], %s418
        %s420 = sand.u32 %s265, 1
        %s421 = smul.addr %s420, 8
        %s422 = scalar_lea.vmem [#allocation12], %s421
        %v424 = vld [vmem:[%s373] sm:$0xff]
        %v425 = vld [vmem:[%s373 + $0x8] sm:$0xff]
        loop: start=0, step=1, limit=8
        $region69: #{tpu_custom_call.1} parent=55 // loop_pre_header
          _
        $region70: #{tpu_custom_call.1} parent=55 // loop_header
          %s427 = sphi 0, %s431
          %p428 = scmp.ge.s32.totalorder %s427, 8
        $region71: #{tpu_custom_call.1} parent=55 // loop_header_branch
          %430 = sbr.rel (%p428) target = $region75
        $region72: #{tpu_custom_call.1} parent=55 // loop_body
          %s432 = sshra.s32 %s427, 7
          %s433 = sand.u32 %s427, 127
          %s434 = sadd.s32 %s432, %s37
          %s435 = smul.u32 %s434, 128
          %s436 = sshra.s32 %s427, 7
          %s437 = sand.u32 %s427, 127
          %s438 = sadd.s32 %s435, %s437
          %s439 = sld [smem:[#allocation4 + %s438]]
          %s440 = scalar_lea.vmem %s373, %s439 [#allocation5]
          %v441 = vld [vmem:[%s440] sm:$0x1]
          %s442 = scalar_lea.vmem [#allocation2], %s427
          %443 = vst [vmem:[%s442] sm:$0x1] %v441
        $region73: #{tpu_custom_call.1} parent=55 // loop_footer
          %s431 = sadd.s32 1, %s427
        $region74: #{tpu_custom_call.1} parent=55 // loop_footer_branch
          %426 = sbr.rel target = $region70
        $region75: #{tpu_custom_call.1} parent=55 // loop_exit
          _
        %v444 = vld [vmem:[#allocation2] sm:$0xff]
        %v445 = vld [vmem:[%s2] sm:$0x1]
        %v446 = vld [vmem:[%s3] sm:$0x1]
        %447 = vadd.xlane.f32.xlu0 %v424
        %v448 = vpop.xlane.xlu0 %447
        %449 = vadd.xlane.f32.xlu0 %v425
        %v450 = vpop.xlane.xlu0 %449
        %v451 = vrcp.pop 128.0
        %v452 = vmul.f32 %v448, %v451
        %v453 = vmul.f32 %v450, %v451
        %v454 = vsub.f32 %v424, %v452
        %v455 = vsub.f32 %v425, %v453
        %v456 = vmul.f32 %v454, %v454
        %v457 = vmul.f32 %v455, %v455
        %458 = vadd.xlane.f32.xlu0 %v456
        %v459 = vpop.xlane.xlu0 %458
        %460 = vadd.xlane.f32.xlu0 %v457
        %v461 = vpop.xlane.xlu0 %460
        %v462 = vmul.f32 %v459, %v451
        %v463 = vmul.f32 %v461, %v451
        %v464 = vadd.f32 %v462, 1e-05
        %v465 = vadd.f32 %v463, 1e-05
        %v466 = vrsqrt.pop %v464
        %v467 = vrsqrt.pop %v465
        %v468 = vmul.f32 %v454, %v466
        %v469 = vmul.f32 %v455, %v467
        %v471 = vlaneseq
        %v472 = vshrl.u32 %v471, 7
        %v473 = vsub.s32 0, %v472
        %v474 = vrot.slane %v445, %v473
        %v476 = vmul.f32 %v468, %v474
        %v477 = vmul.f32 %v469, %v474
        %v479 = vlaneseq
        %v480 = vshrl.u32 %v479, 7
        %v481 = vsub.s32 0, %v480
        %v482 = vrot.slane %v446, %v481
        %v484 = vadd.f32 %v476, %v482
        %v485 = vadd.f32 %v477, %v482
        %v486 = vpack.c.bf16 %v485, %v484
        %v487 = vmul.f32 %v444, 0.088388346
        %v488 = vpack.c.bf16 %v487, %v487
        %489 = vmatprep.subr.bf16.mxu0 0
        %490 = vmatpush1.bf16.xpose.msra.mxu0 0
        %491 = vmatprep.subr.bf16.mxu0 0
        %492 = vmatpush1.bf16.xpose.msra.mxu0 0
        %493 = vmatprep.subr.bf16.mxu0 0
        %494 = vmatpush1.bf16.xpose.msra.mxu0 0
        %495 = vmatprep.subr.bf16.mxu0 0
        %496 = vmatpush1.bf16.xpose.msra.mxu0 0
        %497 = vmatprep.subr.bf16.mxu0 0
        %498 = vmatpush1.bf16.xpose.msra.mxu0 0
        %499 = vmatprep.subr.bf16.mxu0 0
        %500 = vmatpush1.bf16.xpose.msra.mxu0 0
        %501 = vmatprep.subr.bf16.mxu0 0
        %502 = vmatpush1.bf16.xpose.msra.mxu0 0
        %503 = vmatprep.subr.bf16.mxu0 0
        %504 = vmatpush1.bf16.xpose.msra.mxu0 %v486
        %505 = vmatprep.subr.bf16.mxu0 0
        %506 = vmatpush2.bf16.xpose.msra.mxu0 0
        %507 = vmatprep.subr.bf16.mxu0 0
        %508 = vmatpush2.bf16.xpose.msra.mxu0 0
        %509 = vmatprep.subr.bf16.mxu0 0
        %510 = vmatpush2.bf16.xpose.msra.mxu0 0
        %511 = vmatprep.subr.bf16.mxu0 0
        %512 = vmatpush2.bf16.xpose.msra.mxu0 0
        %513 = vmatprep.subr.bf16.mxu0 0
        %514 = vmatpush2.bf16.xpose.msra.mxu0 0
        %515 = vmatprep.subr.bf16.mxu0 0
        %516 = vmatpush2.bf16.xpose.msra.mxu0 0
        %517 = vmatprep.subr.bf16.mxu0 0
        %518 = vmatpush2.bf16.xpose.msra.mxu0 0
        %519 = vmatprep.subr.bf16.mxu0 0
        %520 = vmatpush2.bf16.xpose.msra.mxu0 0
        %521 = vmatprep.mubr.bf16.mxu0 0
        %522 = vmatmul.mubr.bf16.gmra.mxu0 %v488
        %v523 = vpop.f32.mrf.mxu0
        %v524 = vadd.f32 0.0, %v523
        %v525 = vpop.f32.mrf.mxu0
        %v526 = vpop.f32.mrf.mxu0
        %v527 = vpop.f32.mrf.mxu0
        %528 = vdwg.mxu0
        %vm529 = vcmask 130048
        %v530 = vsel %vm529, %v524, -inf
        %531 = vmax.xlane.f32.xlu0 %v530
        %v532 = vpop.xlane.xlu0 %531
        %v533 = vsub.f32 %v524, %v532
        %v534 = vmul.f32 %v533, 1.442695
        %v535 = vpow.pop %v534
        %v536 = vsel %vm529, %v535, 0.0
        %537 = vadd.xlane.f32.xlu0 %v536
        %v538 = vpop.xlane.xlu0 %537
        %v539 = vrcp.pop %v538
        %v540 = vmul.f32 %v535, %v539
        %v541 = vpack.c.bf16 %v540, %v540
        %v543 = vsel %vm529, %v541, 0
        %545 = vmatprep.subr.bf16.mxu0 0
        %546 = vmatpush1.bf16.msra.mxu0 0
        %547 = vmatprep.subr.bf16.mxu0 0
        %548 = vmatpush1.bf16.msra.mxu0 0
        %549 = vmatprep.subr.bf16.mxu0 0
        %550 = vmatpush1.bf16.msra.mxu0 0
        %551 = vmatprep.subr.bf16.mxu0 0
        %552 = vmatpush1.bf16.msra.mxu0 0
        %553 = vmatprep.subr.bf16.mxu0 0
        %554 = vmatpush1.bf16.msra.mxu0 0
        %555 = vmatprep.subr.bf16.mxu0 0
        %556 = vmatpush1.bf16.msra.mxu0 0
        %557 = vmatprep.subr.bf16.mxu0 0
        %558 = vmatpush1.bf16.msra.mxu0 0
        %559 = vmatprep.subr.bf16.mxu0 0
        %560 = vmatpush1.bf16.msra.mxu0 %v486
        %561 = vmatprep.subr.bf16.mxu0 0
        %562 = vmatpush2.bf16.msra.mxu0 0
        %563 = vmatprep.subr.bf16.mxu0 0
        %564 = vmatpush2.bf16.msra.mxu0 0
        %565 = vmatprep.subr.bf16.mxu0 0
        %566 = vmatpush2.bf16.msra.mxu0 0
        %567 = vmatprep.subr.bf16.mxu0 0
        %568 = vmatpush2.bf16.msra.mxu0 0
        %569 = vmatprep.subr.bf16.mxu0 0
        %570 = vmatpush2.bf16.msra.mxu0 0
        %571 = vmatprep.subr.bf16.mxu0 0
        %572 = vmatpush2.bf16.msra.mxu0 0
        %573 = vmatprep.subr.bf16.mxu0 0
        %574 = vmatpush2.bf16.msra.mxu0 0
        %575 = vmatprep.subr.bf16.mxu0 0
        %576 = vmatpush2.bf16.msra.mxu0 0
        %577 = vmatprep.mubr.bf16.mxu0 0
        %578 = vmatmul.mubr.bf16.gmra.mxu0 %v543
        %v579 = vpop.f32.mrf.mxu0
        %v580 = vadd.f32 0.0, %v579
        %v581 = vpop.f32.mrf.mxu0
        %v582 = vpop.f32.mrf.mxu0
        %v583 = vpop.f32.mrf.mxu0
        %584 = vdwg.mxu0
        %v585 = vadd.f32 %v444, %v580
        %586 = vst [vmem:[#allocation2] sm:$0xff] %v585
        %587 = vst [vmem:[%s415] sm:$0xff] %v424
        %588 = vst [vmem:[%s415 + $0x8] sm:$0xff] %v425
        loop: start=0, step=1, limit=8
        $region76: #{tpu_custom_call.1} parent=55 // loop_pre_header
          _
        $region77: #{tpu_custom_call.1} parent=55 // loop_header
          %s590 = sphi 0, %s594
          %p591 = scmp.ge.s32.totalorder %s590, 8
        $region78: #{tpu_custom_call.1} parent=55 // loop_header_branch
          %593 = sbr.rel (%p591) target = $region82
        $region79: #{tpu_custom_call.1} parent=55 // loop_body
          %s595 = sshra.s32 %s590, 7
          %s596 = sand.u32 %s590, 127
          %s597 = sadd.s32 %s595, %s37
          %s598 = smul.u32 %s597, 128
          %s599 = sshra.s32 %s590, 7
          %s600 = sand.u32 %s590, 127
          %s601 = sadd.s32 %s598, %s600
          %s602 = sld [smem:[#allocation4 + %s601]]
          %s603 = scalar_lea.vmem [#allocation2], %s590
          %v604 = vld [vmem:[%s603] sm:$0x1]
          %s605 = scalar_lea.vmem %s415, %s602 [#allocation11]
          %606 = vst [vmem:[%s605] sm:$0x1] %v604
        $region80: #{tpu_custom_call.1} parent=55 // loop_footer
          %s594 = sadd.s32 1, %s590
        $region81: #{tpu_custom_call.1} parent=55 // loop_footer_branch
          %589 = sbr.rel target = $region77
        $region82: #{tpu_custom_call.1} parent=55 // loop_exit
          _
        %v607 = vld [vmem:[%s415] sm:$0xff]
        %v608 = vld [vmem:[%s415 + $0x8] sm:$0xff]
        %v609 = vld [vmem:[%s4] sm:$0x1]
        %v610 = vld [vmem:[%s5] sm:$0x1]
        %611 = vadd.xlane.f32.xlu0 %v607
        %v612 = vpop.xlane.xlu0 %611
        %613 = vadd.xlane.f32.xlu0 %v608
        %v614 = vpop.xlane.xlu0 %613
        %v615 = vmul.f32 %v612, %v451
        %v616 = vmul.f32 %v614, %v451
        %v617 = vsub.f32 %v607, %v615
        %v618 = vsub.f32 %v608, %v616
        %v619 = vmul.f32 %v617, %v617
        %v620 = vmul.f32 %v618, %v618
        %621 = vadd.xlane.f32.xlu0 %v619
        %v622 = vpop.xlane.xlu0 %621
        %623 = vadd.xlane.f32.xlu0 %v620
        %v624 = vpop.xlane.xlu0 %623
        %v625 = vmul.f32 %v622, %v451
        %v626 = vmul.f32 %v624, %v451
        %v627 = vadd.f32 %v625, 1e-05
        %v628 = vadd.f32 %v626, 1e-05
        %v629 = vrsqrt.pop %v627
        %v630 = vrsqrt.pop %v628
        %v631 = vmul.f32 %v617, %v629
        %v632 = vmul.f32 %v618, %v630
        %v634 = vlaneseq
        %v635 = vshrl.u32 %v634, 7
        %v636 = vsub.s32 0, %v635
        %v637 = vrot.slane %v609, %v636
        %v639 = vmul.f32 %v631, %v637
        %v640 = vmul.f32 %v632, %v637
        %v642 = vlaneseq
        %v643 = vshrl.u32 %v642, 7
        %v644 = vsub.s32 0, %v643
        %v645 = vrot.slane %v610, %v644
        %v647 = vadd.f32 %v639, %v645
        %v648 = vadd.f32 %v640, %v645
        %v649 = vpack.c.bf16 %v648, %v647
        %v650 = vld [vmem:[#allocation8] sm:$0xff]
        %v651 = vld [vmem:[#allocation8 + $0x8] sm:$0xff]
        %v652 = vld [vmem:[#allocation8 + $0x10] sm:$0xff]
        %v653 = vld [vmem:[#allocation8 + $0x18] sm:$0xff]
        %v654 = vld [vmem:[#allocation8 + $0x20] sm:$0xff]
        %v655 = vld [vmem:[#allocation8 + $0x28] sm:$0xff]
        %v656 = vld [vmem:[#allocation8 + $0x30] sm:$0xff]
        %v657 = vld [vmem:[#allocation8 + $0x38] sm:$0xff]
        %v658 = vld [vmem:[#allocation8 + $0x40] sm:$0xff]
        %v659 = vld [vmem:[#allocation8 + $0x48] sm:$0xff]
        %v660 = vld [vmem:[#allocation8 + $0x50] sm:$0xff]
        %v661 = vld [vmem:[#allocation8 + $0x58] sm:$0xff]
        %v662 = vld [vmem:[#allocation8 + $0x60] sm:$0xff]
        %v663 = vld [vmem:[#allocation8 + $0x68] sm:$0xff]
        %v664 = vld [vmem:[#allocation8 + $0x70] sm:$0xff]
        %v665 = vld [vmem:[#allocation8 + $0x78] sm:$0xff]
        %v666 = vld [vmem:[%s7] sm:$0x3]
        %v668 = vlaneseq
        %v669 = vshrl.u32 %v668, 7
        %v670 = vsub.s32 0, %v669
        %v671 = vrot.slane %v666, %v670
        %v672 = vlaneseq
        %v673 = vshrl.u32 %v672, 7
        %v674 = vsub.s32 1, %v673
        %v675 = vrot.slane %v666, %v674
        %v694 = vunpack.c.l.b16 %v650
        %v695 = vunpack.c.h.b16 %v650
        %v696 = vunpack.c.l.b16 %v651
        %v697 = vunpack.c.h.b16 %v651
        %v698 = vunpack.c.l.b16 %v652
        %v699 = vunpack.c.h.b16 %v652
        %v700 = vunpack.c.l.b16 %v653
        %v701 = vunpack.c.h.b16 %v653
        %v702 = vunpack.c.l.b16 %v654
        %v703 = vunpack.c.h.b16 %v654
        %v704 = vunpack.c.l.b16 %v655
        %v705 = vunpack.c.h.b16 %v655
        %v706 = vunpack.c.l.b16 %v656
        %v707 = vunpack.c.h.b16 %v656
        %v708 = vunpack.c.l.b16 %v657
        %v709 = vunpack.c.h.b16 %v657
        %v710 = vunpack.c.l.b16 %v658
        %v711 = vunpack.c.h.b16 %v658
        %v712 = vunpack.c.l.b16 %v659
        %v713 = vunpack.c.h.b16 %v659
        %v714 = vunpack.c.l.b16 %v660
        %v715 = vunpack.c.h.b16 %v660
        %v716 = vunpack.c.l.b16 %v661
        %v717 = vunpack.c.h.b16 %v661
        %v718 = vunpack.c.l.b16 %v662
        %v719 = vunpack.c.h.b16 %v662
        %v720 = vunpack.c.l.b16 %v663
        %v721 = vunpack.c.h.b16 %v663
        %v722 = vunpack.c.l.b16 %v664
        %v723 = vunpack.c.h.b16 %v664
        %v724 = vunpack.c.l.b16 %v665
        %v725 = vunpack.c.h.b16 %v665
        %v726 = vpack.c.b16 %v696, %v694
        %v727 = vpack.c.b16 %v697, %v695
        %v728 = vpack.c.b16 %v700, %v698
        %v729 = vpack.c.b16 %v701, %v699
        %v730 = vpack.c.b16 %v704, %v702
        %v731 = vpack.c.b16 %v705, %v703
        %v732 = vpack.c.b16 %v708, %v706
        %v733 = vpack.c.b16 %v709, %v707
        %v734 = vpack.c.b16 %v712, %v710
        %v735 = vpack.c.b16 %v713, %v711
        %v736 = vpack.c.b16 %v716, %v714
        %v737 = vpack.c.b16 %v717, %v715
        %v738 = vpack.c.b16 %v720, %v718
        %v739 = vpack.c.b16 %v721, %v719
        %v740 = vpack.c.b16 %v724, %v722
        %v741 = vpack.c.b16 %v725, %v723
        %758 = vmatprep.subr.bf16.mxu0 %v741
        %759 = vmatpush1.bf16.msra.mxu0 %v740
        %760 = vmatprep.subr.bf16.mxu0 %v739
        %761 = vmatpush1.bf16.msra.mxu0 %v738
        %762 = vmatprep.subr.bf16.mxu0 %v737
        %763 = vmatpush1.bf16.msra.mxu0 %v736
        %764 = vmatprep.subr.bf16.mxu0 %v735
        %765 = vmatpush1.bf16.msra.mxu0 %v734
        %766 = vmatprep.subr.bf16.mxu0 %v733
        %767 = vmatpush1.bf16.msra.mxu0 %v732
        %768 = vmatprep.subr.bf16.mxu0 %v731
        %769 = vmatpush1.bf16.msra.mxu0 %v730
        %770 = vmatprep.subr.bf16.mxu0 %v729
        %771 = vmatpush1.bf16.msra.mxu0 %v728
        %772 = vmatprep.subr.bf16.mxu0 %v727
        %773 = vmatpush1.bf16.msra.mxu0 %v726
        %774 = vmatprep.subr.bf16.mxu0 0
        %775 = vmatpush2.bf16.msra.mxu0 0
        %776 = vmatprep.subr.bf16.mxu0 0
        %777 = vmatpush2.bf16.msra.mxu0 0
        %778 = vmatprep.subr.bf16.mxu0 0
        %779 = vmatpush2.bf16.msra.mxu0 0
        %780 = vmatprep.subr.bf16.mxu0 0
        %781 = vmatpush2.bf16.msra.mxu0 0
        %782 = vmatprep.subr.bf16.mxu0 0
        %783 = vmatpush2.bf16.msra.mxu0 0
        %784 = vmatprep.subr.bf16.mxu0 0
        %785 = vmatpush2.bf16.msra.mxu0 0
        %786 = vmatprep.subr.bf16.mxu0 0
        %787 = vmatpush2.bf16.msra.mxu0 0
        %788 = vmatprep.subr.bf16.mxu0 0
        %789 = vmatpush2.bf16.msra.mxu0 0
        %790 = vmatprep.mubr.bf16.mxu0 0
        %791 = vmatmul.mubr.bf16.gmra.mxu0 %v649
        %v792 = vpop.f32.mrf.mxu0
        %v793 = vadd.f32 %v671, %v792
        %v794 = vpop.f32.mrf.mxu0
        %v795 = vadd.f32 %v675, %v794
        %v796 = vpop.f32.mrf.mxu0
        %v797 = vadd.f32 %v671, %v796
        %v798 = vpop.f32.mrf.mxu0
        %v799 = vadd.f32 %v675, %v798
        %800 = vdwg.mxu0
        %v801 = vmax.f32 %v793, 0.0
        %v802 = vmax.f32 %v795, 0.0
        %v803 = vmax.f32 %v797, 0.0
        %v804 = vmax.f32 %v799, 0.0
        %v805 = vpack.c.bf16 %v803, %v801
        %v806 = vpack.c.bf16 %v804, %v802
        %v807 = vld [vmem:[#allocation10] sm:$0xf]
        %v808 = vld [vmem:[#allocation10 + $0x4] sm:$0xf]
        %v809 = vld [vmem:[#allocation10 + $0x8] sm:$0xf]
        %v810 = vld [vmem:[#allocation10 + $0xc] sm:$0xf]
        %v811 = vld [vmem:[#allocation10 + $0x10] sm:$0xf]
        %v812 = vld [vmem:[#allocation10 + $0x14] sm:$0xf]
        %v813 = vld [vmem:[#allocation10 + $0x18] sm:$0xf]
        %v814 = vld [vmem:[#allocation10 + $0x1c] sm:$0xf]
        %v815 = vld [vmem:[#allocation10 + $0x20] sm:$0xf]
        %v816 = vld [vmem:[#allocation10 + $0x24] sm:$0xf]
        %v817 = vld [vmem:[#allocation10 + $0x28] sm:$0xf]
        %v818 = vld [vmem:[#allocation10 + $0x2c] sm:$0xf]
        %v819 = vld [vmem:[#allocation10 + $0x30] sm:$0xf]
        %v820 = vld [vmem:[#allocation10 + $0x34] sm:$0xf]
        %v821 = vld [vmem:[#allocation10 + $0x38] sm:$0xf]
        %v822 = vld [vmem:[#allocation10 + $0x3c] sm:$0xf]
        %v823 = vld [vmem:[#allocation10 + $0x40] sm:$0xf]
        %v824 = vld [vmem:[#allocation10 + $0x44] sm:$0xf]
        %v825 = vld [vmem:[#allocation10 + $0x48] sm:$0xf]
        %v826 = vld [vmem:[#allocation10 + $0x4c] sm:$0xf]
        %v827 = vld [vmem:[#allocation10 + $0x50] sm:$0xf]
        %v828 = vld [vmem:[#allocation10 + $0x54] sm:$0xf]
        %v829 = vld [vmem:[#allocation10 + $0x58] sm:$0xf]
        %v830 = vld [vmem:[#allocation10 + $0x5c] sm:$0xf]
        %v831 = vld [vmem:[#allocation10 + $0x60] sm:$0xf]
        %v832 = vld [vmem:[#allocation10 + $0x64] sm:$0xf]
        %v833 = vld [vmem:[#allocation10 + $0x68] sm:$0xf]
        %v834 = vld [vmem:[#allocation10 + $0x6c] sm:$0xf]
        %v835 = vld [vmem:[#allocation10 + $0x70] sm:$0xf]
        %v836 = vld [vmem:[#allocation10 + $0x74] sm:$0xf]
        %v837 = vld [vmem:[#allocation10 + $0x78] sm:$0xf]
        %v838 = vld [vmem:[#allocation10 + $0x7c] sm:$0xf]
        %v839 = vld [vmem:[%s9] sm:$0x1]
        %v841 = vlaneseq
        %v842 = vshrl.u32 %v841, 7
        %v843 = vsub.s32 0, %v842
        %v844 = vrot.slane %v839, %v843
        %v878 = vunpack.c.l.b16 %v807
        %v879 = vunpack.c.l.b16 %v808
        %v880 = vunpack.c.l.b16 %v809
        %v881 = vunpack.c.l.b16 %v810
        %v882 = vunpack.c.l.b16 %v811
        %v883 = vunpack.c.l.b16 %v812
        %v884 = vunpack.c.l.b16 %v813
        %v885 = vunpack.c.l.b16 %v814
        %v886 = vunpack.c.l.b16 %v815
        %v887 = vunpack.c.l.b16 %v816
        %v888 = vunpack.c.l.b16 %v817
        %v889 = vunpack.c.l.b16 %v818
        %v890 = vunpack.c.l.b16 %v819
        %v891 = vunpack.c.l.b16 %v820
        %v892 = vunpack.c.l.b16 %v821
        %v893 = vunpack.c.l.b16 %v822
        %v894 = vunpack.c.l.b16 %v823
        %v895 = vunpack.c.l.b16 %v824
        %v896 = vunpack.c.l.b16 %v825
        %v897 = vunpack.c.l.b16 %v826
        %v898 = vunpack.c.l.b16 %v827
        %v899 = vunpack.c.l.b16 %v828
        %v900 = vunpack.c.l.b16 %v829
        %v901 = vunpack.c.l.b16 %v830
        %v902 = vunpack.c.l.b16 %v831
        %v903 = vunpack.c.l.b16 %v832
        %v904 = vunpack.c.l.b16 %v833
        %v905 = vunpack.c.l.b16 %v834
        %v906 = vunpack.c.l.b16 %v835
        %v907 = vunpack.c.l.b16 %v836
        %v908 = vunpack.c.l.b16 %v837
        %v909 = vunpack.c.l.b16 %v838
        %v910 = vpack.c.b16 %v879, %v878
        %v911 = vpack.c.b16 %v881, %v880
        %v912 = vpack.c.b16 %v883, %v882
        %v913 = vpack.c.b16 %v885, %v884
        %v914 = vpack.c.b16 %v887, %v886
        %v915 = vpack.c.b16 %v889, %v888
        %v916 = vpack.c.b16 %v891, %v890
        %v917 = vpack.c.b16 %v893, %v892
        %v918 = vpack.c.b16 %v895, %v894
        %v919 = vpack.c.b16 %v897, %v896
        %v920 = vpack.c.b16 %v899, %v898
        %v921 = vpack.c.b16 %v901, %v900
        %v922 = vpack.c.b16 %v903, %v902
        %v923 = vpack.c.b16 %v905, %v904
        %v924 = vpack.c.b16 %v907, %v906
        %v925 = vpack.c.b16 %v909, %v908
        %942 = vmatprep.subr.bf16.mxu0 0
        %943 = vmatpush1.bf16.msra.mxu0 %v917
        %944 = vmatprep.subr.bf16.mxu0 0
        %945 = vmatpush1.bf16.msra.mxu0 %v916
        %946 = vmatprep.subr.bf16.mxu0 0
        %947 = vmatpush1.bf16.msra.mxu0 %v915
        %948 = vmatprep.subr.bf16.mxu0 0
        %949 = vmatpush1.bf16.msra.mxu0 %v914
        %950 = vmatprep.subr.bf16.mxu0 0
        %951 = vmatpush1.bf16.msra.mxu0 %v913
        %952 = vmatprep.subr.bf16.mxu0 0
        %953 = vmatpush1.bf16.msra.mxu0 %v912
        %954 = vmatprep.subr.bf16.mxu0 0
        %955 = vmatpush1.bf16.msra.mxu0 %v911
        %956 = vmatprep.subr.bf16.mxu0 0
        %957 = vmatpush1.bf16.msra.mxu0 %v910
        %958 = vmatprep.subr.bf16.mxu0 0
        %959 = vmatpush2.bf16.msra.mxu0 %v925
        %960 = vmatprep.subr.bf16.mxu0 0
        %961 = vmatpush2.bf16.msra.mxu0 %v924
        %962 = vmatprep.subr.bf16.mxu0 0
        %963 = vmatpush2.bf16.msra.mxu0 %v923
        %964 = vmatprep.subr.bf16.mxu0 0
        %965 = vmatpush2.bf16.msra.mxu0 %v922
        %966 = vmatprep.subr.bf16.mxu0 0
        %967 = vmatpush2.bf16.msra.mxu0 %v921
        %968 = vmatprep.subr.bf16.mxu0 0
        %969 = vmatpush2.bf16.msra.mxu0 %v920
        %970 = vmatprep.subr.bf16.mxu0 0
        %971 = vmatpush2.bf16.msra.mxu0 %v919
        %972 = vmatprep.subr.bf16.mxu0 0
        %973 = vmatpush2.bf16.msra.mxu0 %v918
        %974 = vmatprep.mubr.bf16.mxu0 %v806
        %975 = vmatmul.mubr.bf16.gmra.mxu0 %v805
        %v976 = vpop.f32.mrf.mxu0
        %v977 = vadd.f32 %v844, %v976
        %v978 = vpop.f32.mrf.mxu0
        %v979 = vpop.f32.mrf.mxu0
        %v980 = vadd.f32 %v844, %v979
        %v981 = vpop.f32.mrf.mxu0
        %982 = vdwg.mxu0
        %v983 = vadd.f32 %v607, %v977
        %v984 = vadd.f32 %v608, %v980
        %985 = vst [vmem:[%s415] sm:$0xff] %v983
        %986 = vst [vmem:[%s415 + $0x8] sm:$0xff] %v984
        %987 = vst.msk [vmem:[%s422] sm:$0xff] %vm529, %v540
        %s988 = sand.u32 %s239, 1
        %s989 = scalar_lea.sflag [#allocation7], %s988
        %s990 = sand.u32 %s239, 1
        %s991 = smul.addr %s990, 16
        %s992 = scalar_lea.vmem [#allocation11], %s991
        %s993 = sand.u32 %s265, 1
        %s994 = scalar_lea.sflag [#allocation13], %s993
        %s995 = sand.u32 %s265, 1
        %s996 = smul.addr %s995, 8
        %s997 = scalar_lea.vmem [#allocation12], %s996
        // Predicated region
        $region83: #{tpu_custom_call.1} parent=55 // pred_check
          %p998 = pneg %p249
        $region84: #{tpu_custom_call.1} parent=55 // pred_check_branch
          %1000 = sbr.rel (%p998) target = $region86
        $region85: #{tpu_custom_call.1} parent=55 // pred_region
          %s1002 = ssub.s32 256, 256
          %1003 = vsyncadd %s989, %s1002
          %s1004 = smul.addr %s37, 2
          %s1005 = smul.addr %s1004, 128
          %s1006 = scalar_lea.hbm %s10, %s1005
          %s1007 = sshll.u32 %s992, 4
          %s1008 = int_to_ptr.vmem [resolvable:$true] %s1007
          %1013 = dma.vmem_to_hbm [thread:$0]  %s1008, 256, %s1006, %s989, 128, 128, 8
        $region86: #{tpu_custom_call.1} parent=55 // pred_fallthru
          _
        // Predicated region
        $region87: #{tpu_custom_call.1} parent=55 // pred_check
          %p1014 = pneg %p275
        $region88: #{tpu_custom_call.1} parent=55 // pred_check_branch
          %1016 = sbr.rel (%p1014) target = $region90
        $region89: #{tpu_custom_call.1} parent=55 // pred_region
          %s1018 = ssub.s32 128, 128
          %1019 = vsyncadd %s994, %s1018
          %s1020 = smul.addr %s37, 128
          %s1021 = scalar_lea.hbm %s11, %s1020
          %s1023 = sshll.u32 %s997, 4
          %s1024 = int_to_ptr.vmem [resolvable:$true] %s1023
          %1026 = dma.vmem_to_hbm [thread:$0]  %s1024, 128, %s1021, %s994
        $region90: #{tpu_custom_call.1} parent=55 // pred_fallthru
          _
      $region56: #{tpu_custom_call.1} parent=5 // pred_fallthru
        _
      %p1027 = scmp.le.s32.totalorder 2, %s32
      // Predicated region
      $region91: #{tpu_custom_call.1} parent=5 // pred_check
        %p1028 = pneg %p1027
      $region92: #{tpu_custom_call.1} parent=5 // pred_check_branch
        %1030 = sbr.rel (%p1028) target = $region94
      $region93: #{tpu_custom_call.1} parent=5 // pred_region
        %s1031 = ssub.s32 %s32, 2
        // Predicated region
        $region95: #{tpu_custom_call.1} parent=93 // pred_check
          %p1032 = pneg %p255
        $region96: #{tpu_custom_call.1} parent=93 // pred_check_branch
          %1034 = sbr.rel (%p1032) target = $region98
        $region97: #{tpu_custom_call.1} parent=93 // pred_region
          %s1035 = sand.u32 %s240, 1
          %s1036 = scalar_lea.sflag [#allocation7], %s1035
          %s1037 = sand.u32 %s240, 1
          %s1038 = smul.addr %s1037, 16
          %s1039 = scalar_lea.vmem [#allocation11], %s1038
          %1040 = dma.done %s1036, 256
        $region98: #{tpu_custom_call.1} parent=93 // pred_fallthru
          _
        // Predicated region
        $region99: #{tpu_custom_call.1} parent=93 // pred_check
          %p1041 = pneg %p281
        $region100: #{tpu_custom_call.1} parent=93 // pred_check_branch
          %1043 = sbr.rel (%p1041) target = $region102
        $region101: #{tpu_custom_call.1} parent=93 // pred_region
          %s1044 = sand.u32 %s266, 1
          %s1045 = scalar_lea.sflag [#allocation13], %s1044
          %s1046 = sand.u32 %s266, 1
          %s1047 = smul.addr %s1046, 8
          %s1048 = scalar_lea.vmem [#allocation12], %s1047
          %1049 = dma.done %s1045, 128
        $region102: #{tpu_custom_call.1} parent=93 // pred_fallthru
          _
      $region94: #{tpu_custom_call.1} parent=5 // pred_fallthru
        _
    $region6: #{tpu_custom_call.1} parent=1 // loop_footer
      %s36 = sadd.s32 1, %s32
    $region7: #{tpu_custom_call.1} parent=1 // loop_footer_branch
      %31 = sbr.rel target = $region3
    $region8: #{tpu_custom_call.1} parent=1 // loop_exit
      _
    %1050 = vsyncpa [#allocation6], 1
    %s1051 = scalar_lea.sflag [#allocation6], 1
    %1052 = vsyncpa %s1051, 1
    %1053 = vsyncpa [#allocation9], 1
    %1054 = vsyncpa [#allocation7], 1
    %s1055 = scalar_lea.sflag [#allocation7], 1
    %1056 = vsyncpa %s1055, 1
    %1057 = vsyncpa [#allocation13], 1
    %s1058 = scalar_lea.sflag [#allocation13], 1
    %1059 = vsyncpa %s1058, 1

</llo_original>
